<compile_context>
chip_gen: v7x
topology: tpu7x:2x2x1
jax: 0.10.0
libtpu: 0.0.40
codegen_flags: <defaults>
</compile_context>

<pallas_src>
import functools

import jax
import jax.numpy as jnp
from jax import lax
from jax.experimental import pallas as pl
from jax.experimental.pallas import tpu as pltpu


def _round_up(x, m):
    return ((x + m - 1) // m) * m


def _cmb_embed_kernel(idx_ref, tab_ref, out_ref):
    """One grid step: TN tokens, one 3-hot matmul against the fused table."""
    ids = idx_ref[...]                                   # (TN, 3) int32, pre-offset
    tn = ids.shape[0]
    vp = tab_ref.shape[0]

    iota = lax.broadcasted_iota(jnp.int32, (tn, vp), 1)  # (TN, Vp)
    hot = (iota == ids[:, 0:1]) | (iota == ids[:, 1:2]) | (iota == ids[:, 2:3])
    onehot = hot.astype(jnp.float32)                     # exactly three 1s per row

    out_ref[...] = jnp.dot(
        onehot, tab_ref[...], preferred_element_type=jnp.float32
    ).astype(out_ref.dtype)


@functools.partial(jax.jit, static_argnames=("tn",))
def cmb_word_embed(attr_seq_tsr, table1, table2, table3, *, tn=512):
    """attr_seq_tsr: (B, S, 3) int -> (B, S, E) float32."""
    B, S, _ = attr_seq_tsr.shape
    V1, E = table1.shape
    V2 = table2.shape[0]
    V3 = table3.shape[0]
    N = B * S

    # ---- tile-size selection -------------------------------------------------
    # Big tiles amortize the ~0.35us/step overhead; keep tn a multiple of 8,
    # never larger than the (rounded) token count, and keep >=2 grid steps when
    # possible so v7x's two TensorCores both get work.
    tn_eff = min(tn, _round_up(N, 8))
    if N >= 16 and pl.cdiv(N, tn_eff) < 2:
        tn_eff = _round_up(pl.cdiv(N, 2), 8)
    N_pad = _round_up(N, tn_eff)

    # ---- fused, padded table -------------------------------------------------
    Vtot = V1 + V2 + V3
    Vp = _round_up(Vtot, 128)      # lane-aligned contraction dim for the one-hot
    E_pad = _round_up(E, 128)      # lane-dense output stores (unmasked vst)

    fused = jnp.zeros((Vp, E_pad), dtype=jnp.float32)
    fused = fused.at[:V1, :E].set(table1.astype(jnp.float32))
    fused = fused.at[V1:V1 + V2, :E].set(table2.astype(jnp.float32))
    fused = fused.at[V1 + V2:Vtot, :E].set(table3.astype(jnp.float32))

    # ---- indices: one (N_pad, 3) array, offset into the fused table ----------
    flat = attr_seq_tsr.reshape(N, 3).astype(jnp.int32)
    if N_pad != N:
        flat = jnp.pad(flat, ((0, N_pad - N), (0, 0)))   # pad rows hit row 0/V1/V1+V2
    offsets = jnp.array([0, V1, V1 + V2], dtype=jnp.int32)
    flat = flat + offsets[None, :]

    grid = (N_pad // tn_eff,)

    idx_spec = pl.BlockSpec((tn_eff, 3), lambda i: (i, 0))
    tab_spec = pl.BlockSpec((Vp, E_pad), lambda i: (0, 0))
    out_spec = pl.BlockSpec((tn_eff, E_pad), lambda i: (i, 0))

    # VMEM budget: double-buffered out + idx blocks, (conservatively) 2x table.
    est_vmem = (2 * tn_eff * E_pad + 2 * tn_eff * 128 + 2 * Vp * E_pad) * 4
    cparams = {"dimension_semantics": ("parallel",)}
    if est_vmem > 24 * 1024 * 1024:
        cparams["vmem_limit_bytes"] = min(2 * est_vmem, 100 * 1024 * 1024)

    out_flat = pl.pallas_call(
        _cmb_embed_kernel,
        out_shape=jax.ShapeDtypeStruct((N_pad, E_pad), jnp.float32),
        grid_spec=pltpu.PrefetchScalarGridSpec(
            num_scalar_prefetch=0,
            grid=grid,
            in_specs=[idx_spec, tab_spec],
            out_specs=out_spec,
        ),
        compiler_params=pltpu.CompilerParams(**cparams),
    )(flat, fused)

    return out_flat[:N, :E].reshape(B, S, E)


if __name__ == "__main__":
    # Small shapes consistent with the module: embed_dims=(7,10,10), small E.
    B, S, E = 2, 8, 128
    embed_dims = (7, 10, 10)

    key = jax.random.PRNGKey(0)
    k1, k2, k3, k4, k5, k6 = jax.random.split(key, 6)

    # nn.Embedding weights ~ N(0,1); deterministic synthetic init.
    table1 = jax.random.normal(k1, (embed_dims[0] + 1, E), dtype=jnp.float32)
    table2 = jax.random.normal(k2, (embed_dims[1] + 1, E), dtype=jnp.float32)
    table3 = jax.random.normal(k3, (embed_dims[2] + 1, E), dtype=jnp.float32)

    # Integer attribute ids within each embedding's vocab.
    idx_a = jax.random.randint(k4, (B, S, 1), 0, embed_dims[0] + 1, dtype=jnp.int32)
    idx_b = jax.random.randint(k5, (B, S, 1), 0, embed_dims[1] + 1, dtype=jnp.int32)
    idx_c = jax.random.randint(k6, (B, S, 1), 0, embed_dims[2] + 1, dtype=jnp.int32)
    attr_seq_tsr = jnp.concatenate([idx_a, idx_b, idx_c], axis=-1)  # (B, S, 3)

    out = cmb_word_embed(attr_seq_tsr, table1, table2, table3)
    out = jax.block_until_ready(out)

    # Pure-JAX reference (same semantics as the PyTorch forward).
    ref = (jnp.take(table1, attr_seq_tsr[..., 0], axis=0)
           + jnp.take(table2, attr_seq_tsr[..., 1], axis=0)
           + jnp.take(table3, attr_seq_tsr[..., 2], axis=0))

    assert out.shape == (B, S, E)
    assert jnp.allclose(out, ref, atol=1e-5, rtol=1e-5)
    # TODO(synk): out-of-range indices silently contribute a zero row (PyTorch
    # nn.Embedding would raise); no in-kernel bounds check is emitted.
    print("KERNEL_OK")
</pallas_src>

<mosaic_0001>
module attributes {stable_mosaic.version = 11 : i64} {
  func.func @_cmb_embed_kernel(%arg0: i32, %arg1: memref<8x3xi32, #tpu.memory_space<vmem>>, %arg2: memref<128x128xf32, #tpu.memory_space<vmem>>, %arg3: memref<8x128xf32, #tpu.memory_space<vmem>>) attributes {dimension_semantics = [#tpu.dimension_semantics<parallel>], iteration_bounds = array<i64: 2>, scalar_prefetch = 0 : i64, scratch_operands = 0 : i64, tpu.core_type = #tpu.core_type<tc>, window_params = [{transform_indices = @transform_0, window_bounds = array<i64: 8, 3>}, {pipeline_mode = #tpu.pipeline_mode<synchronous>, transform_indices = @transform_1, window_bounds = array<i64: 128, 128>}, {transform_indices = @transform_2, window_bounds = array<i64: 8, 128>}]} {
    %c0 = arith.constant 0 : index
    %c0_0 = arith.constant 0 : index
    %0 = vector.load %arg1[%c0, %c0_0] : memref<8x3xi32, #tpu.memory_space<vmem>>, vector<8x3xi32>
    %1 = tpu.iota {dimensions = array<i32: 1>} : vector<8x128xi32>
    %2 = vector.extract_strided_slice %0 {offsets = [0, 0], sizes = [8, 1], strides = [1, 1]} : vector<8x3xi32> to vector<8x1xi32>
    %3 = vector.broadcast %2 : vector<8x1xi32> to vector<8x128xi32>
    %4 = arith.cmpi eq, %1, %3 : vector<8x128xi32>
    %5 = vector.extract_strided_slice %0 {offsets = [0, 1], sizes = [8, 1], strides = [1, 1]} : vector<8x3xi32> to vector<8x1xi32>
    %6 = vector.broadcast %5 : vector<8x1xi32> to vector<8x128xi32>
    %7 = arith.cmpi eq, %1, %6 : vector<8x128xi32>
    %8 = arith.ori %4, %7 : vector<8x128xi1>
    %9 = vector.extract_strided_slice %0 {offsets = [0, 2], sizes = [8, 1], strides = [1, 1]} : vector<8x3xi32> to vector<8x1xi32>
    %10 = vector.broadcast %9 : vector<8x1xi32> to vector<8x128xi32>
    %11 = arith.cmpi eq, %1, %10 : vector<8x128xi32>
    %12 = arith.ori %8, %11 : vector<8x128xi1>
    %13 = arith.extui %12 : vector<8x128xi1> to vector<8x128xi32>
    %14 = arith.sitofp %13 : vector<8x128xi32> to vector<8x128xf32>
    %c0_1 = arith.constant 0 : index
    %c0_2 = arith.constant 0 : index
    %15 = vector.load %arg2[%c0_1, %c0_2] : memref<128x128xf32, #tpu.memory_space<vmem>>, vector<128x128xf32>
    %cst = arith.constant dense<0.000000e+00> : vector<8x128xf32>
    %16 = tpu.matmul %14, %15, %cst {dimension_numbers = #tpu.dot_dimension_numbers<[1], [0], [0], [1], [0, 0, 1, 1], [], []>} : vector<8x128xf32>, vector<128x128xf32>, vector<8x128xf32> -> vector<8x128xf32>
    %c0_3 = arith.constant 0 : index
    %c0_4 = arith.constant 0 : index
    %17 = vector.load %arg3[%c0_3, %c0_4] : memref<8x128xf32, #tpu.memory_space<vmem>>, vector<8x128xf32>
    tpu.vector_store %arg3[%c0_3, %c0_4], %16 {strides = array<i32>} : memref<8x128xf32, #tpu.memory_space<vmem>>, vector<8x128xf32>,
    return
  }
  func.func @transform_0(%arg0: i32) -> (i32, i32) {
    %c0_i32 = arith.constant 0 : i32
    %c0_i32_0 = arith.constant 0 : i32
    return %arg0, %c0_i32 : i32, i32
  }
  func.func @transform_1(%arg0: i32) -> (i32, i32) {
    %c0_i32 = arith.constant 0 : i32
    %c0_i32_0 = arith.constant 0 : i32
    %c0_i32_1 = arith.constant 0 : i32
    return %c0_i32, %c0_i32_0 : i32, i32
  }
  func.func @transform_2(%arg0: i32) -> (i32, i32) {
    %c0_i32 = arith.constant 0 : i32
    %c0_i32_0 = arith.constant 0 : i32
    return %arg0, %c0_i32 : i32, i32
  }
}

</mosaic_0001>

<llo_original>
// kernel: cmb_word_embed.1
$region0: #{cmb_word_embed.1}
  #allocation0 [shape = 'u32[]', space=smem, size = 0x4, offset = 0x4, fixed_abs, tag = 'smem constant byte address 0x4 - core index']
  #allocation1 [shape = 'u32[144,128]{1,0:T(1,128)}', space=vmem, size = 0x12000, scoped, tag = 'internal scratch']
  %s0 = inlined_call_operand.vmem [shape: s32[16,3], index: 0, kind: input, shape index: {}]
  %s1 = inlined_call_operand.vmem [shape: f32[128,128], index: 1, kind: input, shape index: {}]
  %s2 = inlined_call_operand.hbm [shape: f32[16,128], index: 2, kind: output, shape index: {}]
  %s3 = sld [smem:[#allocation0]]
  $region41: #{cmb_word_embed.1} parent=0
    _
  %s5 = ssub.s32 1, %s3
  %s6 = scalar_select 0, %s5, %s3
  $region1: #{cmb_word_embed.1} parent=0
    #allocation2 [shape = 'u8[8192]{0}', space=vmem, size = 0x2000, scoped, tag = 'output window, operand 0']
    #allocation3 [shape = 's32[2]{0}', space=sflag, size = 0x8, scoped, tag = 'scoped memory for cmb_word_embed.1']
    %7 = vsyncpa [#allocation3], 0
    %s8 = scalar_lea.sflag [#allocation3], 1
    %9 = vsyncpa %s8, 0
    loop: start=0, step=1, limit=4
    $region2: #{cmb_word_embed.1} parent=1 // loop_pre_header
      _
    $region3: #{cmb_word_embed.1} parent=1 // loop_header
      %s11 = sphi 0, %s15
      %p12 = scmp.ge.s32.totalorder %s11, 4
      %s21 = sphi 0, %s23
      %s24 = sphi 0, %s21
      %s25 = sphi 0, %s24
      %s41 = sphi 0, %s25
      %s45 = sphi 0, %s45
      %s47 = sphi 0, %s45
      %s48 = sphi 0, %s47
      %s62 = sphi 0, %s48
      %s68 = sphi 0, %s70
      %s71 = sphi 0, %s68
      %s72 = sphi 0, %s71
      %s88 = sphi 0, %s72
    $region4: #{cmb_word_embed.1} parent=1 // loop_header_branch
      %14 = sbr.rel (%p12) target = $region8
    $region5: #{cmb_word_embed.1} parent=1 // loop_body
      %s16 = ssub.s32 %s11, 1
      %s17 = ssub.s32 %s11, 2
      %s18 = sadd.s32 %s11, 1
      %s19 = ssub.s32 %s11, %s18
      %p20 = scmp.eq.s32.totalorder %s19, 0
      %s22 = sadd.s32 %s21, 1
      %s23 = scalar_select %p20, %s21, %s22
      %p26 = pneg %p20
      %p27 = scmp.eq.s32.totalorder %s11, 1
      %p28 = por %p26, %p27
      %p29 = scmp.ne.s32.totalorder %s21, %s24
      %p30 = scmp.eq.s32.totalorder %s11, 0
      %p31 = por %p29, %p30
      %p32 = scmp.ne.s32.totalorder %s21, %s24
      %p33 = scmp.eq.s32.totalorder %s16, 1
      %p34 = por %p32, %p33
      %p35 = scmp.ne.s32.totalorder %s24, %s25
      %p36 = scmp.eq.s32.totalorder %s16, 0
      %p37 = por %p35, %p36
      %p38 = scmp.ne.s32.totalorder %s24, %s25
      %p39 = scmp.eq.s32.totalorder %s17, 1
      %p40 = por %p38, %p39
      %p42 = scmp.ne.s32.totalorder %s25, %s41
      %p43 = scmp.eq.s32.totalorder %s17, 0
      %p44 = por %p42, %p43
      %s46 = sadd.s32 %s45, 1
      %p49 = scmp.eq.s32.totalorder %s11, 1
      %p50 = scmp.ne.s32.totalorder %s45, %s47
      %p51 = scmp.eq.s32.totalorder %s11, 0
      %p52 = por %p50, %p51
      %p53 = scmp.ne.s32.totalorder %s45, %s47
      %p54 = scmp.eq.s32.totalorder %s16, 1
      %p55 = por %p53, %p54
      %p56 = scmp.ne.s32.totalorder %s47, %s48
      %p57 = scmp.eq.s32.totalorder %s16, 0
      %p58 = por %p56, %p57
      %p59 = scmp.ne.s32.totalorder %s47, %s48
      %p60 = scmp.eq.s32.totalorder %s17, 1
      %p61 = por %p59, %p60
      %p63 = scmp.ne.s32.totalorder %s48, %s62
      %p64 = scmp.eq.s32.totalorder %s17, 0
      %p65 = por %p63, %p64
      %s66 = ssub.s32 %s11, %s18
      %p67 = scmp.eq.s32.totalorder %s66, 0
      %s69 = sadd.s32 %s68, 1
      %s70 = scalar_select %p67, %s68, %s69
      %p73 = pneg %p67
      %p74 = scmp.eq.s32.totalorder %s11, 1
      %p75 = por %p73, %p74
      %p76 = scmp.ne.s32.totalorder %s68, %s71
      %p77 = scmp.eq.s32.totalorder %s11, 0
      %p78 = por %p76, %p77
      %p79 = scmp.ne.s32.totalorder %s68, %s71
      %p80 = scmp.eq.s32.totalorder %s16, 1
      %p81 = por %p79, %p80
      %p82 = scmp.ne.s32.totalorder %s71, %s72
      %p83 = scmp.eq.s32.totalorder %s16, 0
      %p84 = por %p82, %p83
      %p85 = scmp.ne.s32.totalorder %s71, %s72
      %p86 = scmp.eq.s32.totalorder %s17, 1
      %p87 = por %p85, %p86
      %p89 = scmp.ne.s32.totalorder %s72, %s88
      %p90 = scmp.eq.s32.totalorder %s17, 0
      %p91 = por %p89, %p90
      %p92 = scmp.le.s32.totalorder 1, %s11
      %p93 = scmp.lt.s32.totalorder %s11, 3
      %p94 = pnand %p92, %p93
      %p95 = pneg %p94
      // Predicated region
      $region9: #{cmb_word_embed.1} parent=5 // pred_check
        _
      $region10: #{cmb_word_embed.1} parent=5 // pred_check_branch
        %97 = sbr.rel (%p94) target = $region12
      $region11: #{cmb_word_embed.1} parent=5 // pred_region
        %s98 = ssub.s32 %s11, 1
        // Predicated region
        $region13: #{cmb_word_embed.1} parent=11 // pred_check
          %p99 = pneg %p58
        $region14: #{cmb_word_embed.1} parent=11 // pred_check_branch
          %101 = sbr.rel (%p99) target = $region16
        $region15: #{cmb_word_embed.1} parent=11 // pred_region
          _
        $region16: #{cmb_word_embed.1} parent=11 // pred_fallthru
          _
      $region12: #{cmb_word_embed.1} parent=5 // pred_fallthru
        _
      %p102 = scmp.lt.s32.totalorder %s11, 2
      // Predicated region
      $region17: #{cmb_word_embed.1} parent=5 // pred_check
        %p103 = pneg %p102
      $region18: #{cmb_word_embed.1} parent=5 // pred_check_branch
        %105 = sbr.rel (%p103) target = $region20
      $region19: #{cmb_word_embed.1} parent=5 // pred_region
        // Predicated region
        $region21: #{cmb_word_embed.1} parent=19 // pred_check
          %p106 = pneg %p31
        $region22: #{cmb_word_embed.1} parent=19 // pred_check_branch
          %108 = sbr.rel (%p106) target = $region24
        $region23: #{cmb_word_embed.1} parent=19 // pred_region
          %p109 = scmp.lt.s32.totalorder %s11, 1
          %s110 = scalar_select %p109, %s11, 1
          %s111 = smul.addr %s110, 8
          %s112 = scalar_lea.vmem %s0, %s111
        $region24: #{cmb_word_embed.1} parent=19 // pred_fallthru
          _
      $region20: #{cmb_word_embed.1} parent=5 // pred_fallthru
        _
      %p113 = scmp.le.s32.totalorder 1, %s11
      %p114 = scmp.lt.s32.totalorder %s11, 3
      %p115 = pnand %p113, %p114
      %p116 = pneg %p115
      // Predicated region
      $region25: #{cmb_word_embed.1} parent=5 // pred_check
        _
      $region26: #{cmb_word_embed.1} parent=5 // pred_check_branch
        %118 = sbr.rel (%p115) target = $region28
      $region27: #{cmb_word_embed.1} parent=5 // pred_region
        %s119 = ssub.s32 %s11, 1
        %p120 = scmp.lt.s32.totalorder %s16, 1
        %s121 = scalar_select %p120, %s16, 1
        %s122 = smul.addr %s121, 8
        %s123 = scalar_lea.vmem %s0, %s122
        %p124 = pneg %p37
        %p125 = pneg %p34
        %p126 = pneg %p58
        %p127 = pneg %p55
        %p128 = pneg %p84
        %p129 = pneg %p81
        %s130 = sand.u32 %s71, 1
        %s131 = scalar_lea.sflag [#allocation3], %s130
        %s132 = sand.u32 %s71, 1
        %s133 = smul.addr %s132, 8
        %s134 = scalar_lea.vmem [#allocation2], %s133
        %p135 = scmp.lt.s32.totalorder %s16, 1
        %s136 = scalar_select %p135, %s16, 1
        %s137 = smul.addr %s136, 8
        %s138 = scalar_lea.vmem %s0, %s137
        %v139 = vld [vmem:[%s138] sm:$0xff]
        %v140 = vlaneseq
        %v141 = vand.u32 %v140, 127
        %142 = vset.pattern.permute.xlu0 0
        %143 = vperm.xlu0 %142, %v139
        %v144 = vpop.permute.xlu0 %143
        %vm145 = vcmp.eq.s32.totalorder %v141, %v144
        %146 = vset.pattern.permute.xlu0 1
        %147 = vperm.xlu0 %146, %v139
        %v148 = vpop.permute.xlu0 %147
        %vm149 = vcmp.eq.s32.totalorder %v141, %v148
        %vm150 = vmor %vm145, %vm149
        %151 = vset.pattern.permute.xlu0 2
        %152 = vperm.xlu0 %151, %v139
        %v153 = vpop.permute.xlu0 %152
        %vm154 = vcmp.eq.s32.totalorder %v141, %v153
        %vm155 = vmor %vm150, %vm154
        %v156 = vsel %vm155, 1, 0
        %v157 = vcvt.s32.f32 %v156
        %v158 = vld [vmem:[%s1] sm:$0xff]
        %v159 = vld [vmem:[%s1 + $0x8] sm:$0xff]
        %v160 = vld [vmem:[%s1 + $0x10] sm:$0xff]
        %v161 = vld [vmem:[%s1 + $0x18] sm:$0xff]
        %v162 = vld [vmem:[%s1 + $0x20] sm:$0xff]
        %v163 = vld [vmem:[%s1 + $0x28] sm:$0xff]
        %v164 = vld [vmem:[%s1 + $0x30] sm:$0xff]
        %v165 = vld [vmem:[%s1 + $0x38] sm:$0xff]
        %v166 = vld [vmem:[%s1 + $0x40] sm:$0xff]
        %v167 = vld [vmem:[%s1 + $0x48] sm:$0xff]
        %v168 = vld [vmem:[%s1 + $0x50] sm:$0xff]
        %v169 = vld [vmem:[%s1 + $0x58] sm:$0xff]
        %v170 = vld [vmem:[%s1 + $0x60] sm:$0xff]
        %v171 = vld [vmem:[%s1 + $0x68] sm:$0xff]
        %v172 = vld [vmem:[%s1 + $0x70] sm:$0xff]
        %v173 = vld [vmem:[%s1 + $0x78] sm:$0xff]
        %174 = vmatprep.subr.mxu0 0.0
        %175 = vmatpush1.msra.mxu0 %v158
        %176 = vmatprep.subr.mxu0 0.0
        %177 = vmatpush1.msra.mxu0 %v159
        %178 = vmatprep.subr.mxu0 0.0
        %179 = vmatpush1.msra.mxu0 %v160
        %180 = vmatprep.subr.mxu0 0.0
        %181 = vmatpush1.msra.mxu0 %v161
        %182 = vmatprep.subr.mxu0 0.0
        %183 = vmatpush1.msra.mxu0 %v162
        %184 = vmatprep.subr.mxu0 0.0
        %185 = vmatpush1.msra.mxu0 %v163
        %186 = vmatprep.subr.mxu0 0.0
        %187 = vmatpush1.msra.mxu0 %v164
        %188 = vmatprep.subr.mxu0 0.0
        %189 = vmatpush1.msra.mxu0 %v165
        %190 = vmatprep.subr.mxu0 0.0
        %191 = vmatpush1.msra.mxu0 %v166
        %192 = vmatprep.subr.mxu0 0.0
        %193 = vmatpush1.msra.mxu0 %v167
        %194 = vmatprep.subr.mxu0 0.0
        %195 = vmatpush1.msra.mxu0 %v168
        %196 = vmatprep.subr.mxu0 0.0
        %197 = vmatpush1.msra.mxu0 %v169
        %198 = vmatprep.subr.mxu0 0.0
        %199 = vmatpush1.msra.mxu0 %v170
        %200 = vmatprep.subr.mxu0 0.0
        %201 = vmatpush1.msra.mxu0 %v171
        %202 = vmatprep.subr.mxu0 0.0
        %203 = vmatpush1.msra.mxu0 %v172
        %204 = vmatprep.subr.mxu0 0.0
        %205 = vmatpush1.msra.mxu0 %v173
        %206 = vmatprep.subr.mxu0 0.0
        %207 = vmatpush1.msra.mxu0 0.0
        %208 = vmatprep.subr.mxu0 0.0
        %209 = vmatpush1.msra.mxu0 0.0
        %210 = vmatprep.subr.mxu0 0.0
        %211 = vmatpush1.msra.mxu0 0.0
        %212 = vmatprep.subr.mxu0 0.0
        %213 = vmatpush1.msra.mxu0 0.0
        %214 = vmatprep.subr.mxu0 0.0
        %215 = vmatpush1.msra.mxu0 0.0
        %216 = vmatprep.subr.mxu0 0.0
        %217 = vmatpush1.msra.mxu0 0.0
        %218 = vmatprep.subr.mxu0 0.0
        %219 = vmatpush1.msra.mxu0 0.0
        %220 = vmatprep.subr.mxu0 0.0
        %221 = vmatpush1.msra.mxu0 0.0
        %222 = vmatprep.subr.mxu0 0.0
        %223 = vmatpush1.msra.mxu0 0.0
        %224 = vmatprep.subr.mxu0 0.0
        %225 = vmatpush1.msra.mxu0 0.0
        %226 = vmatprep.subr.mxu0 0.0
        %227 = vmatpush1.msra.mxu0 0.0
        %228 = vmatprep.subr.mxu0 0.0
        %229 = vmatpush1.msra.mxu0 0.0
        %230 = vmatprep.subr.mxu0 0.0
        %231 = vmatpush1.msra.mxu0 0.0
        %232 = vmatprep.subr.mxu0 0.0
        %233 = vmatpush1.msra.mxu0 0.0
        %234 = vmatprep.subr.mxu0 0.0
        %235 = vmatpush1.msra.mxu0 0.0
        %236 = vmatprep.subr.mxu0 0.0
        %237 = vmatpush1.msra.mxu0 0.0
        %238 = vmatprep.mubr.f32.mxu0 0.0
        %239 = vmatmul.mubr.f32.gmra.mrb[0].mxu0 %v157
        %v240 = vpop.f32.mrb[0].mxu0
        %v241 = vadd.f32 0.0, %v240
        %v242 = vpop.f32.mrb[0].mxu0
        %243 = vdwg.mxu0
        %244 = vst [vmem:[%s134] sm:$0xff] %v241
        %s245 = sand.u32 %s71, 1
        %s246 = scalar_lea.sflag [#allocation3], %s245
        %s247 = sand.u32 %s71, 1
        %s248 = smul.addr %s247, 8
        %s249 = scalar_lea.vmem [#allocation2], %s248
        // Predicated region
        $region29: #{cmb_word_embed.1} parent=27 // pred_check
          %p250 = pneg %p81
        $region30: #{cmb_word_embed.1} parent=27 // pred_check_branch
          %252 = sbr.rel (%p250) target = $region32
        $region31: #{cmb_word_embed.1} parent=27 // pred_region
          %s254 = ssub.s32 128, 128
          %255 = vsyncadd %s246, %s254
          %s256 = smul.addr %s16, 128
          %s257 = scalar_lea.hbm %s2, %s256
          %s259 = sshll.u32 %s249, 4
          %s260 = int_to_ptr.vmem [resolvable:$true] %s259
          %262 = dma.vmem_to_hbm [thread:$0]  %s260, 128, %s257, %s246
        $region32: #{cmb_word_embed.1} parent=27 // pred_fallthru
          _
      $region28: #{cmb_word_embed.1} parent=5 // pred_fallthru
        _
      %p263 = scmp.le.s32.totalorder 2, %s11
      // Predicated region
      $region33: #{cmb_word_embed.1} parent=5 // pred_check
        %p264 = pneg %p263
      $region34: #{cmb_word_embed.1} parent=5 // pred_check_branch
        %266 = sbr.rel (%p264) target = $region36
      $region35: #{cmb_word_embed.1} parent=5 // pred_region
        %s267 = ssub.s32 %s11, 2
        // Predicated region
        $region37: #{cmb_word_embed.1} parent=35 // pred_check
          %p268 = pneg %p87
        $region38: #{cmb_word_embed.1} parent=35 // pred_check_branch
          %270 = sbr.rel (%p268) target = $region40
        $region39: #{cmb_word_embed.1} parent=35 // pred_region
          %s271 = sand.u32 %s72, 1
          %s272 = scalar_lea.sflag [#allocation3], %s271
          %s273 = sand.u32 %s72, 1
          %s274 = smul.addr %s273, 8
          %s275 = scalar_lea.vmem [#allocation2], %s274
          %276 = dma.done %s272, 128
        $region40: #{cmb_word_embed.1} parent=35 // pred_fallthru
          _
      $region36: #{cmb_word_embed.1} parent=5 // pred_fallthru
        _
    $region6: #{cmb_word_embed.1} parent=1 // loop_footer
      %s15 = sadd.s32 1, %s11
    $region7: #{cmb_word_embed.1} parent=1 // loop_footer_branch
      %10 = sbr.rel target = $region3
    $region8: #{cmb_word_embed.1} parent=1 // loop_exit
      _
    %277 = vsyncpa [#allocation3], 1
    %s278 = scalar_lea.sflag [#allocation3], 1
    %279 = vsyncpa %s278, 1

</llo_original>
